<compile_context>
chip_gen: v5e
topology: v5e:2x2
jax: 0.10.0
libtpu: 0.0.40
codegen_flags: <defaults>
</compile_context>

<pallas_src>
import math
import numpy as np
import jax
import jax.numpy as jnp
from jax import lax
from jax.experimental import pallas as pl
from jax.experimental.pallas import tpu as pltpu


# -----------------------------------------------------------------------------
# Cyclic Positional Encoding (host-side numpy; mirrors the PyTorch __init__)
# -----------------------------------------------------------------------------
def _basesin(x, T, fai=0.0):
    return np.sin(2 * np.pi / T * np.abs(np.mod(x, 2 * T) - T) + fai)


def _basecos(x, T, fai=0.0):
    return np.cos(2 * np.pi / T * np.abs(np.mod(x, 2 * T) - T) + fai)


def cyclic_positional_encoding(n_position, emb_dim, mean_pooling=True):
    Td_set = np.linspace(np.power(n_position, 1 / (emb_dim // 2)), n_position,
                         emb_dim // 2, dtype='int')
    x = np.zeros((n_position, emb_dim))
    for i in range(emb_dim):
        Td = Td_set[i // 3 * 3 + 1] if i // 3 * 3 + 1 < emb_dim // 2 else Td_set[-1]
        fai = 0 if i <= emb_dim // 2 else 2 * np.pi * ((-i + emb_dim // 2) / (emb_dim // 2))
        longer_pattern = np.arange(0, np.ceil(n_position / Td) * Td, 0.01)
        idxs = np.linspace(0, len(longer_pattern), n_position, dtype='int', endpoint=False)
        if i % 2 == 1:
            x[:, i] = _basecos(longer_pattern, Td, fai)[idxs]
        else:
            x[:, i] = _basesin(longer_pattern, Td, fai)[idxs]
    pattern = x.astype(np.float32)
    pattern_sum = np.zeros_like(pattern)
    arange = np.arange(n_position)
    pooling = [-2, -1, 0, 1, 2] if mean_pooling else [0]
    time = 0
    for i in pooling:
        time += 1
        index = (arange + i + n_position) % n_position
        pattern_sum = pattern_sum + pattern[index]
    pattern = (1.0 / time) * pattern_sum - pattern.mean(0)
    return pattern.astype(np.float32)


# -----------------------------------------------------------------------------
# visited_time: serial tour walk (pointer chasing), mirrors the PyTorch loop.
# TODO(synk): inherently serial scalar pointer chase; kept in plain JAX
#             (lax.fori_loop) rather than faking a vectorized Pallas version.
# -----------------------------------------------------------------------------
def _compute_visited_time(solutions):
    B, S = solutions.shape
    arange = jnp.arange(B)

    def body(i, carry):
        vt, pre = carry
        nxt = solutions[arange, pre]               # (B,)
        vt = vt.at[arange, nxt].set(i + 1)
        return vt, nxt

    vt, _ = lax.fori_loop(
        0, S, body,
        (jnp.zeros((B, S), jnp.int32), jnp.zeros((B,), jnp.int32)))
    return vt


# -----------------------------------------------------------------------------
# Helpers
# -----------------------------------------------------------------------------
def _round_up(x, m):
    return ((x + m - 1) // m) * m


def _pick_row_tile(m, bytes_per_row, resident_bytes, budget=12 << 20):
    """Pick the row tile TM: (a) keeps the double-buffered pipeline footprint
    under a conservative scoped-VMEM budget (v5e default is 16 MiB, v6e/v7x
    32 MiB), (b) is a multiple of 8 sublanes, (c) divides m exactly whenever a
    reasonable divisor exists (no pad + output re-slice), and (d) prefers >= 2
    equal grid steps at large m so both v7x TensorCores get work."""
    avail = max(budget - resident_bytes, 1 << 20)
    cap = avail // max(bytes_per_row, 1)
    cap = max(64, min(2048, (cap // 8) * 8))
    m8 = _round_up(m, 8)
    if m8 <= cap:
        if m8 >= 1024 and m % 16 == 0:
            return m // 2              # two equal "parallel" steps
        return m8
    for tm in range(cap, 255, -8):     # largest multiple-of-8 divisor of m
        if m % tm == 0:
            return tm
    return cap


# -----------------------------------------------------------------------------
# Fused NFE + PFE kernel over flattened (B*S) row tiles
# -----------------------------------------------------------------------------
def _make_fused_kernel(node_dim, seq_len, use_gather):
    def kernel(idx_ref, x_ref, wt_ref, pat_ref, nfe_ref, pfe_ref):
        TM = idx_ref.shape[0]
        E = pat_ref.shape[1]

        # --- NFE: x @ W^T with K = node_dim (2..4).  Unrolled VPU broadcast
        # multiply-add (the MXU would be <3% utilized at K=2..4); computed in
        # f32 so a bf16 I/O path stays correct on v5e as well.
        x = x_ref[...].astype(jnp.float32)          # (TM, node_dim)
        w = wt_ref[...].astype(jnp.float32)         # (node_dim, E)
        acc = x[:, 0:1] * w[0:1, :]
        for k in range(1, node_dim):
            acc = acc + x[:, k:k + 1] * w[k:k + 1, :]
        nfe_ref[...] = acc.astype(nfe_ref.dtype)

        # --- PFE: gather pattern rows by (visited_time % S).
        idx = idx_ref[...]                           # (TM, 1) int32, in [0, S)
        if use_gather:
            # Chunk the lane (emb) axis so the broadcast index array stays a
            # few vregs even at TM = 2048.
            ch = 512 if E % 512 == 0 else (256 if E % 256 == 0 else 128)
            ch = min(ch, E)
            for c0 in range(0, E, ch):
                gidx = jnp.broadcast_to(idx, (TM, ch))
                pfe_ref[:, c0:c0 + ch] = jnp.take_along_axis(
                    pat_ref[:, c0:c0 + ch], gidx, axis=0,
                    mode="promise_in_bounds").astype(pfe_ref.dtype)
        else:
            # Fallback (selected statically at setup): exact 0/1 one-hot MXU
            # matmul, (TM, S) @ (S, E).
            iota = lax.broadcasted_iota(jnp.int32, (TM, seq_len), 1)
            onehot = (idx == iota).astype(pat_ref.dtype)
            pfe = jnp.dot(onehot, pat_ref[...],
                          preferred_element_type=jnp.float32)
            pfe_ref[...] = pfe.astype(pfe_ref.dtype)

    return kernel


def _fused_pallas(idx2d, x2d, weight_t_pad, pattern_pad, use_gather):
    M, node_dim = x2d.shape
    S, E = pattern_pad.shape
    io_b = jnp.dtype(x2d.dtype).itemsize
    pat_b = jnp.dtype(pattern_pad.dtype).itemsize

    # Per-row VMEM bytes of the double-buffered pipeline: the idx and x blocks
    # are lane-padded to 128, plus the two (TM, E) output tiles.
    bytes_per_row = 2 * (128 * 4 + 128 * io_b + 2 * E * io_b)
    resident = 2 * (S + 8) * E * pat_b            # resident pattern + weight_t
    TM = _pick_row_tile(M, bytes_per_row, resident)

    steps = pl.cdiv(M, TM)
    M_pad = steps * TM
    if M_pad != M:
        # Remainder rows: pad idx with 0 (a valid gather index) and x with 0;
        # the extra rows are sliced away only in this (non-divisible) case.
        idx2d = jnp.pad(idx2d, ((0, M_pad - M), (0, 0)))
        x2d = jnp.pad(x2d, ((0, M_pad - M), (0, 0)))

    kernel = _make_fused_kernel(node_dim, S, use_gather)
    nfe, pfe = pl.pallas_call(
        kernel,
        out_shape=(jax.ShapeDtypeStruct((M_pad, E), x2d.dtype),
                   jax.ShapeDtypeStruct((M_pad, E), pattern_pad.dtype)),
        grid_spec=pltpu.PrefetchScalarGridSpec(
            num_scalar_prefetch=0,
            grid=(steps,),
            in_specs=[
                pl.BlockSpec((TM, 1), lambda i: (i, 0)),          # gather indices
                pl.BlockSpec((TM, node_dim), lambda i: (i, 0)),   # node features
                pl.BlockSpec((node_dim, E), lambda i: (0, 0)),    # W^T (resident)
                pl.BlockSpec((S, E), lambda i: (0, 0)),           # CPE pattern (resident)
            ],
            out_specs=(
                pl.BlockSpec((TM, E), lambda i: (i, 0)),          # NFE slab
                pl.BlockSpec((TM, E), lambda i: (i, 0)),          # PFE slab
            ),
        ),
        compiler_params=pltpu.CompilerParams(dimension_semantics=("parallel",)),
    )(idx2d, x2d, weight_t_pad, pattern_pad)

    if M_pad != M:
        nfe, pfe = nfe[:M], pfe[:M]
    return nfe, pfe


# -----------------------------------------------------------------------------
# Module wrapper (mirrors the PyTorch EmbeddingNet forward semantics)
# -----------------------------------------------------------------------------
class EmbeddingNet:
    def __init__(self, node_dim, embedding_dim, seq_length, key,
                 io_dtype=jnp.float32):
        self.node_dim = node_dim
        self.embedding_dim = embedding_dim
        self.seq_length = seq_length
        self.io_dtype = io_dtype

        # nn.Linear(node_dim, embedding_dim, bias=False) weight, initialized
        # like init_parameters(): uniform(-1/sqrt(node_dim), 1/sqrt(node_dim)).
        stdv = 1.0 / math.sqrt(node_dim)
        self.weight = jax.random.uniform(key, (embedding_dim, node_dim),
                                         jnp.float32, -stdv, stdv)
        self.pattern = jnp.asarray(
            cyclic_positional_encoding(seq_length, embedding_dim))

        # One-time parameter preprocessing (NOT per forward call): transpose the
        # Linear weight and pad the lane (emb) axis of both parameter tensors to
        # a multiple of 128 so every kernel store is an unmasked lane-dense vst.
        self.emb_pad = _round_up(embedding_dim, 128)
        wt = jnp.transpose(self.weight)
        pat = self.pattern
        if self.emb_pad != embedding_dim:
            padw = self.emb_pad - embedding_dim
            wt = jnp.pad(wt, ((0, 0), (0, padw)))
            pat = jnp.pad(pat, ((0, 0), (0, padw)))
        self.weight_t_pad = wt.astype(io_dtype)
        self.pattern_pad = pat.astype(io_dtype)

        # One-time compile+run probe (at setup, never per call): does the
        # sublane dynamic-gather PFE path lower on this jax/TPU combo?  If not,
        # statically select the proven one-hot MXU path.
        self.use_gather = self._probe_gather()

    def _probe_gather(self):
        try:
            idx = jnp.zeros((8, 1), jnp.int32)
            xp = jnp.zeros((8, self.node_dim), self.io_dtype)
            out = _fused_pallas(idx, xp, self.weight_t_pad, self.pattern_pad, True)
            jax.block_until_ready(out)
            return True
        except Exception:
            return False

    def __call__(self, x, solutions, visited_time=None):
        B, S, node_dim = x.shape

        if visited_time is None:
            visited_time = _compute_visited_time(solutions)
        visited_time = visited_time.astype(jnp.int32)

        # Flatten both sub-problems over all B*S rows (indices are all in
        # [0, S) against one shared pattern, so no per-batch offset is needed).
        idx2d = (visited_time % S).reshape(B * S, 1)
        x2d = x.reshape(B * S, node_dim).astype(self.io_dtype)

        nfe2d, pfe2d = _fused_pallas(idx2d, x2d, self.weight_t_pad,
                                     self.pattern_pad, self.use_gather)

        emb = self.embedding_dim
        if self.emb_pad != emb:
            nfe2d = nfe2d[:, :emb]
            pfe2d = pfe2d[:, :emb]
        return (nfe2d.reshape(B, S, emb), pfe2d.reshape(B, S, emb), visited_time)


if __name__ == "__main__":
    B, S, node_dim, emb = 2, 8, 4, 32

    key = jax.random.PRNGKey(0)
    kw, kx, kp = jax.random.split(key, 3)

    net = EmbeddingNet(node_dim, emb, S, kw)

    # Inputs
    x = jax.random.normal(kx, (B, S, node_dim), dtype=jnp.float32)

    # solutions[b, i] = successor of node i on a random cyclic tour
    sols = []
    for b in range(B):
        perm = np.asarray(jax.random.permutation(jax.random.fold_in(kp, b), S))
        nxt = np.zeros(S, dtype=np.int32)
        nxt[perm] = np.roll(perm, -1)
        sols.append(nxt)
    solutions = jnp.asarray(np.stack(sols), dtype=jnp.int32)

    # Whole forward jits cleanly: no host syncs / per-call probes inside.
    fwd = jax.jit(net.__call__)
    nfe, pfe, vt = fwd(x, solutions)
    jax.block_until_ready((nfe, pfe, vt))

    # Pure-JAX reference check of the forward semantics
    nfe_ref = jnp.einsum("bsn,en->bse", x, net.weight)
    pfe_ref = net.pattern[(vt % S).astype(jnp.int32)]
    assert np.allclose(np.asarray(nfe), np.asarray(nfe_ref), atol=1e-5), "NFE mismatch"
    assert np.allclose(np.asarray(pfe), np.asarray(pfe_ref), atol=1e-6), "PFE mismatch"

    print("KERNEL_OK")
</pallas_src>

<mosaic_0001>
module attributes {stable_mosaic.version = 11 : i64} {
  func.func @kernel(%arg0: i32, %arg1: memref<8x1xi32, #tpu.memory_space<vmem>>, %arg2: memref<8x4xf32, #tpu.memory_space<vmem>>, %arg3: memref<4x128xf32, #tpu.memory_space<vmem>>, %arg4: memref<8x128xf32, #tpu.memory_space<vmem>>, %arg5: memref<8x128xf32, #tpu.memory_space<vmem>>, %arg6: memref<8x128xf32, #tpu.memory_space<vmem>>) attributes {dimension_semantics = [#tpu.dimension_semantics<parallel>], iteration_bounds = array<i64: 1>, scalar_prefetch = 0 : i64, scratch_operands = 0 : i64, tpu.core_type = #tpu.core_type<tc>, window_params = [{transform_indices = @transform_0, window_bounds = array<i64: 8, 1>}, {transform_indices = @transform_1, window_bounds = array<i64: 8, 4>}, {pipeline_mode = #tpu.pipeline_mode<synchronous>, transform_indices = @transform_2, window_bounds = array<i64: 4, 128>}, {pipeline_mode = #tpu.pipeline_mode<synchronous>, transform_indices = @transform_3, window_bounds = array<i64: 8, 128>}, {transform_indices = @transform_4, window_bounds = array<i64: 8, 128>}, {transform_indices = @transform_5, window_bounds = array<i64: 8, 128>}]} {
    %c0 = arith.constant 0 : index
    %c0_0 = arith.constant 0 : index
    %0 = vector.load %arg2[%c0, %c0_0] : memref<8x4xf32, #tpu.memory_space<vmem>>, vector<8x4xf32>
    %c0_1 = arith.constant 0 : index
    %c0_2 = arith.constant 0 : index
    %1 = vector.load %arg3[%c0_1, %c0_2] : memref<4x128xf32, #tpu.memory_space<vmem>>, vector<4x128xf32>
    %2 = vector.extract_strided_slice %0 {offsets = [0, 0], sizes = [8, 1], strides = [1, 1]} : vector<8x4xf32> to vector<8x1xf32>
    %3 = vector.extract_strided_slice %1 {offsets = [0, 0], sizes = [1, 128], strides = [1, 1]} : vector<4x128xf32> to vector<1x128xf32>
    %4 = vector.broadcast %2 : vector<8x1xf32> to vector<8x128xf32>
    %5 = vector.broadcast %3 : vector<1x128xf32> to vector<8x128xf32>
    %6 = arith.mulf %4, %5 : vector<8x128xf32>
    %7 = vector.extract_strided_slice %0 {offsets = [0, 1], sizes = [8, 1], strides = [1, 1]} : vector<8x4xf32> to vector<8x1xf32>
    %8 = vector.extract_strided_slice %1 {offsets = [1, 0], sizes = [1, 128], strides = [1, 1]} : vector<4x128xf32> to vector<1x128xf32>
    %9 = vector.broadcast %7 : vector<8x1xf32> to vector<8x128xf32>
    %10 = vector.broadcast %8 : vector<1x128xf32> to vector<8x128xf32>
    %11 = arith.mulf %9, %10 : vector<8x128xf32>
    %12 = arith.addf %6, %11 : vector<8x128xf32>
    %13 = vector.extract_strided_slice %0 {offsets = [0, 2], sizes = [8, 1], strides = [1, 1]} : vector<8x4xf32> to vector<8x1xf32>
    %14 = vector.extract_strided_slice %1 {offsets = [2, 0], sizes = [1, 128], strides = [1, 1]} : vector<4x128xf32> to vector<1x128xf32>
    %15 = vector.broadcast %13 : vector<8x1xf32> to vector<8x128xf32>
    %16 = vector.broadcast %14 : vector<1x128xf32> to vector<8x128xf32>
    %17 = arith.mulf %15, %16 : vector<8x128xf32>
    %18 = arith.addf %12, %17 : vector<8x128xf32>
    %19 = vector.extract_strided_slice %0 {offsets = [0, 3], sizes = [8, 1], strides = [1, 1]} : vector<8x4xf32> to vector<8x1xf32>
    %20 = vector.extract_strided_slice %1 {offsets = [3, 0], sizes = [1, 128], strides = [1, 1]} : vector<4x128xf32> to vector<1x128xf32>
    %21 = vector.broadcast %19 : vector<8x1xf32> to vector<8x128xf32>
    %22 = vector.broadcast %20 : vector<1x128xf32> to vector<8x128xf32>
    %23 = arith.mulf %21, %22 : vector<8x128xf32>
    %24 = arith.addf %18, %23 : vector<8x128xf32>
    %c0_3 = arith.constant 0 : index
    %c0_4 = arith.constant 0 : index
    %25 = vector.load %arg5[%c0_3, %c0_4] : memref<8x128xf32, #tpu.memory_space<vmem>>, vector<8x128xf32>
    tpu.vector_store %arg5[%c0_3, %c0_4], %24 {strides = array<i32>} : memref<8x128xf32, #tpu.memory_space<vmem>>, vector<8x128xf32>,
    %c0_5 = arith.constant 0 : index
    %c0_6 = arith.constant 0 : index
    %26 = vector.load %arg1[%c0_5, %c0_6] : memref<8x1xi32, #tpu.memory_space<vmem>>, vector<8x1xi32>
    %27 = vector.shape_cast %26 : vector<8x1xi32> to vector<8x1xi32>
    %28 = vector.broadcast %27 : vector<8x1xi32> to vector<8x128xi32>
    %c0_7 = arith.constant 0 : index
    %c0_8 = arith.constant 0 : index
    %29 = vector.load %arg4[%c0_7, %c0_8] : memref<8x128xf32, #tpu.memory_space<vmem>>, vector<8x128xf32>
    %30 = vector.shape_cast %28 : vector<8x128xi32> to vector<8x128x1xi32>
    %31 = vector.shape_cast %30 : vector<8x128x1xi32> to vector<8x128xi32>
    %32 = tpu.dynamic_gather %29[%31] in [0] : vector<8x128xf32>, vector<8x128xi32> -> vector<8x128xf32>
    %c0_9 = arith.constant 0 : index
    %c0_10 = arith.constant 0 : index
    %33 = vector.load %arg6[%c0_9, %c0_10] : memref<8x128xf32, #tpu.memory_space<vmem>>, vector<8x128xf32>
    tpu.vector_store %arg6[%c0_9, %c0_10], %32 {strides = array<i32>} : memref<8x128xf32, #tpu.memory_space<vmem>>, vector<8x128xf32>,
    return
  }
  func.func @transform_0(%arg0: i32) -> (i32, i32) {
    %c0_i32 = arith.constant 0 : i32
    %c0_i32_0 = arith.constant 0 : i32
    return %arg0, %c0_i32 : i32, i32
  }
  func.func @transform_1(%arg0: i32) -> (i32, i32) {
    %c0_i32 = arith.constant 0 : i32
    %c0_i32_0 = arith.constant 0 : i32
    return %arg0, %c0_i32 : i32, i32
  }
  func.func @transform_2(%arg0: i32) -> (i32, i32) {
    %c0_i32 = arith.constant 0 : i32
    %c0_i32_0 = arith.constant 0 : i32
    %c0_i32_1 = arith.constant 0 : i32
    return %c0_i32, %c0_i32_0 : i32, i32
  }
  func.func @transform_3(%arg0: i32) -> (i32, i32) {
    %c0_i32 = arith.constant 0 : i32
    %c0_i32_0 = arith.constant 0 : i32
    %c0_i32_1 = arith.constant 0 : i32
    return %c0_i32, %c0_i32_0 : i32, i32
  }
  func.func @transform_4(%arg0: i32) -> (i32, i32) {
    %c0_i32 = arith.constant 0 : i32
    %c0_i32_0 = arith.constant 0 : i32
    return %arg0, %c0_i32 : i32, i32
  }
  func.func @transform_5(%arg0: i32) -> (i32, i32) {
    %c0_i32 = arith.constant 0 : i32
    %c0_i32_0 = arith.constant 0 : i32
    return %arg0, %c0_i32 : i32, i32
  }
}

module attributes {stable_mosaic.version = 11 : i64} {
  func.func @kernel(%arg0: i32, %arg1: memref<16x1xi32, #tpu.memory_space<vmem>>, %arg2: memref<16x4xf32, #tpu.memory_space<vmem>>, %arg3: memref<4x128xf32, #tpu.memory_space<vmem>>, %arg4: memref<8x128xf32, #tpu.memory_space<vmem>>, %arg5: memref<16x128xf32, #tpu.memory_space<vmem>>, %arg6: memref<16x128xf32, #tpu.memory_space<vmem>>) attributes {dimension_semantics = [#tpu.dimension_semantics<parallel>], iteration_bounds = array<i64: 1>, scalar_prefetch = 0 : i64, scratch_operands = 0 : i64, tpu.core_type = #tpu.core_type<tc>, window_params = [{transform_indices = @transform_0, window_bounds = array<i64: 16, 1>}, {transform_indices = @transform_1, window_bounds = array<i64: 16, 4>}, {pipeline_mode = #tpu.pipeline_mode<synchronous>, transform_indices = @transform_2, window_bounds = array<i64: 4, 128>}, {pipeline_mode = #tpu.pipeline_mode<synchronous>, transform_indices = @transform_3, window_bounds = array<i64: 8, 128>}, {transform_indices = @transform_4, window_bounds = array<i64: 16, 128>}, {transform_indices = @transform_5, window_bounds = array<i64: 16, 128>}]} {
    %c0 = arith.constant 0 : index
    %c0_0 = arith.constant 0 : index
    %0 = vector.load %arg2[%c0, %c0_0] : memref<16x4xf32, #tpu.memory_space<vmem>>, vector<16x4xf32>
    %c0_1 = arith.constant 0 : index
    %c0_2 = arith.constant 0 : index
    %1 = vector.load %arg3[%c0_1, %c0_2] : memref<4x128xf32, #tpu.memory_space<vmem>>, vector<4x128xf32>
    %2 = vector.extract_strided_slice %0 {offsets = [0, 0], sizes = [16, 1], strides = [1, 1]} : vector<16x4xf32> to vector<16x1xf32>
    %3 = vector.extract_strided_slice %1 {offsets = [0, 0], sizes = [1, 128], strides = [1, 1]} : vector<4x128xf32> to vector<1x128xf32>
    %4 = vector.broadcast %2 : vector<16x1xf32> to vector<16x128xf32>
    %5 = vector.broadcast %3 : vector<1x128xf32> to vector<16x128xf32>
    %6 = arith.mulf %4, %5 : vector<16x128xf32>
    %7 = vector.extract_strided_slice %0 {offsets = [0, 1], sizes = [16, 1], strides = [1, 1]} : vector<16x4xf32> to vector<16x1xf32>
    %8 = vector.extract_strided_slice %1 {offsets = [1, 0], sizes = [1, 128], strides = [1, 1]} : vector<4x128xf32> to vector<1x128xf32>
    %9 = vector.broadcast %7 : vector<16x1xf32> to vector<16x128xf32>
    %10 = vector.broadcast %8 : vector<1x128xf32> to vector<16x128xf32>
    %11 = arith.mulf %9, %10 : vector<16x128xf32>
    %12 = arith.addf %6, %11 : vector<16x128xf32>
    %13 = vector.extract_strided_slice %0 {offsets = [0, 2], sizes = [16, 1], strides = [1, 1]} : vector<16x4xf32> to vector<16x1xf32>
    %14 = vector.extract_strided_slice %1 {offsets = [2, 0], sizes = [1, 128], strides = [1, 1]} : vector<4x128xf32> to vector<1x128xf32>
    %15 = vector.broadcast %13 : vector<16x1xf32> to vector<16x128xf32>
    %16 = vector.broadcast %14 : vector<1x128xf32> to vector<16x128xf32>
    %17 = arith.mulf %15, %16 : vector<16x128xf32>
    %18 = arith.addf %12, %17 : vector<16x128xf32>
    %19 = vector.extract_strided_slice %0 {offsets = [0, 3], sizes = [16, 1], strides = [1, 1]} : vector<16x4xf32> to vector<16x1xf32>
    %20 = vector.extract_strided_slice %1 {offsets = [3, 0], sizes = [1, 128], strides = [1, 1]} : vector<4x128xf32> to vector<1x128xf32>
    %21 = vector.broadcast %19 : vector<16x1xf32> to vector<16x128xf32>
    %22 = vector.broadcast %20 : vector<1x128xf32> to vector<16x128xf32>
    %23 = arith.mulf %21, %22 : vector<16x128xf32>
    %24 = arith.addf %18, %23 : vector<16x128xf32>
    %c0_3 = arith.constant 0 : index
    %c0_4 = arith.constant 0 : index
    %25 = vector.load %arg5[%c0_3, %c0_4] : memref<16x128xf32, #tpu.memory_space<vmem>>, vector<16x128xf32>
    tpu.vector_store %arg5[%c0_3, %c0_4], %24 {strides = array<i32>} : memref<16x128xf32, #tpu.memory_space<vmem>>, vector<16x128xf32>,
    %c0_5 = arith.constant 0 : index
    %c0_6 = arith.constant 0 : index
    %26 = vector.load %arg1[%c0_5, %c0_6] : memref<16x1xi32, #tpu.memory_space<vmem>>, vector<16x1xi32>
    %27 = tpu.iota {dimensions = array<i32: 1>} : vector<16x8xi32>
    %28 = vector.broadcast %26 : vector<16x1xi32> to vector<16x8xi32>
    %29 = arith.cmpi eq, %28, %27 : vector<16x8xi32>
    %30 = arith.extui %29 : vector<16x8xi1> to vector<16x8xi32>
    %31 = arith.sitofp %30 : vector<16x8xi32> to vector<16x8xf32>
    %c0_7 = arith.constant 0 : index
    %c0_8 = arith.constant 0 : index
    %32 = vector.load %arg4[%c0_7, %c0_8] : memref<8x128xf32, #tpu.memory_space<vmem>>, vector<8x128xf32>
    %cst = arith.constant dense<0.000000e+00> : vector<16x128xf32>
    %33 = tpu.matmul %31, %32, %cst {dimension_numbers = #tpu.dot_dimension_numbers<[1], [0], [0], [1], [0, 0, 1, 1], [], []>} : vector<16x8xf32>, vector<8x128xf32>, vector<16x128xf32> -> vector<16x128xf32>
    %c0_9 = arith.constant 0 : index
    %c0_10 = arith.constant 0 : index
    %34 = vector.load %arg6[%c0_9, %c0_10] : memref<16x128xf32, #tpu.memory_space<vmem>>, vector<16x128xf32>
    tpu.vector_store %arg6[%c0_9, %c0_10], %33 {strides = array<i32>} : memref<16x128xf32, #tpu.memory_space<vmem>>, vector<16x128xf32>,
    return
  }
  func.func @transform_0(%arg0: i32) -> (i32, i32) {
    %c0_i32 = arith.constant 0 : i32
    %c0_i32_0 = arith.constant 0 : i32
    return %arg0, %c0_i32 : i32, i32
  }
  func.func @transform_1(%arg0: i32) -> (i32, i32) {
    %c0_i32 = arith.constant 0 : i32
    %c0_i32_0 = arith.constant 0 : i32
    return %arg0, %c0_i32 : i32, i32
  }
  func.func @transform_2(%arg0: i32) -> (i32, i32) {
    %c0_i32 = arith.constant 0 : i32
    %c0_i32_0 = arith.constant 0 : i32
    %c0_i32_1 = arith.constant 0 : i32
    return %c0_i32, %c0_i32_0 : i32, i32
  }
  func.func @transform_3(%arg0: i32) -> (i32, i32) {
    %c0_i32 = arith.constant 0 : i32
    %c0_i32_0 = arith.constant 0 : i32
    %c0_i32_1 = arith.constant 0 : i32
    return %c0_i32, %c0_i32_0 : i32, i32
  }
  func.func @transform_4(%arg0: i32) -> (i32, i32) {
    %c0_i32 = arith.constant 0 : i32
    %c0_i32_0 = arith.constant 0 : i32
    return %arg0, %c0_i32 : i32, i32
  }
  func.func @transform_5(%arg0: i32) -> (i32, i32) {
    %c0_i32 = arith.constant 0 : i32
    %c0_i32_0 = arith.constant 0 : i32
    return %arg0, %c0_i32 : i32, i32
  }
}

</mosaic_0001>

<llo_original>
// kernel: tpu_custom_call.1
$region0: #{tpu_custom_call.1}
  #allocation0 [shape = 'u32[]', space=smem, size = 0x4, offset = 0x4, fixed_abs, tag = 'smem constant byte address 0x4 - core index']
  #allocation1 [shape = 'u32[72,128]{1,0:T(1,128)}', space=vmem, size = 0x9000, scoped, tag = 'internal scratch']
  %s0 = inlined_call_operand.vmem [shape: s32[8,1], index: 0, kind: input, shape index: {}]
  %s1 = inlined_call_operand.vmem [shape: f32[8,4], index: 1, kind: input, shape index: {}]
  %s2 = inlined_call_operand.vmem [shape: f32[4,128], index: 2, kind: input, shape index: {}]
  %s3 = inlined_call_operand.vmem [shape: f32[8,128], index: 3, kind: input, shape index: {}]
  %s4 = inlined_call_operand.hbm [shape: f32[8,128], index: 4, kind: output, shape index: {0}]
  %s5 = inlined_call_operand.hbm [shape: f32[8,128], index: 5, kind: output, shape index: {1}]
  %6 = xla_tuple %s4, %s5
  %s7 = sld [smem:[#allocation0]]
  $region34: #{tpu_custom_call.1} parent=0
    _
  %s9 = ssub.s32 1, %s7
  %s10 = scalar_select 0, %s9, %s7
  $region1: #{tpu_custom_call.1} parent=0
    #allocation2 [shape = 'u8[4096]{0}', space=vmem, size = 0x1000, scoped, tag = 'output window, operand 0, single buffered']
    #allocation3 [shape = 's32[1]{0}', space=sflag, size = 0x4, scoped, tag = 'scoped memory for tpu_custom_call.1']
    #allocation4 [shape = 'u8[4096]{0}', space=vmem, size = 0x1000, scoped, tag = 'output window, operand 1, single buffered']
    #allocation5 [shape = 's32[1]{0}', space=sflag, size = 0x4, scoped, tag = 'scoped memory for tpu_custom_call.1']
    %11 = vsyncpa [#allocation3], 0
    %12 = vsyncpa [#allocation5], 0
    // Predicated region
    $region2: #{tpu_custom_call.1} parent=1 // pred_check
      _
    $region3: #{tpu_custom_call.1} parent=1 // pred_check_branch
      %14 = sbr.rel (0) target = $region5
    $region4: #{tpu_custom_call.1} parent=1 // pred_region
      _
    $region5: #{tpu_custom_call.1} parent=1 // pred_fallthru
      _
    // Predicated region
    $region6: #{tpu_custom_call.1} parent=1 // pred_check
      _
    $region7: #{tpu_custom_call.1} parent=1 // pred_check_branch
      %16 = sbr.rel (0) target = $region9
    $region8: #{tpu_custom_call.1} parent=1 // pred_region
      _
    $region9: #{tpu_custom_call.1} parent=1 // pred_fallthru
      _
    // Predicated region
    $region10: #{tpu_custom_call.1} parent=1 // pred_check
      _
    $region11: #{tpu_custom_call.1} parent=1 // pred_check_branch
      %18 = sbr.rel (0) target = $region13
    $region12: #{tpu_custom_call.1} parent=1 // pred_region
      _
    $region13: #{tpu_custom_call.1} parent=1 // pred_fallthru
      _
    // Predicated region
    $region14: #{tpu_custom_call.1} parent=1 // pred_check
      _
    $region15: #{tpu_custom_call.1} parent=1 // pred_check_branch
      %20 = sbr.rel (0) target = $region17
    $region16: #{tpu_custom_call.1} parent=1 // pred_region
      _
    $region17: #{tpu_custom_call.1} parent=1 // pred_fallthru
      _
    %v21 = vld [vmem:[%s1] sm:$0xff]
    %v22 = vld [vmem:[%s2] sm:$0xf]
    %24 = vset.pattern.permute.xlu0 0
    %25 = vperm.xlu0 %24, %v21
    %v26 = vpop.permute.xlu0 %25
    %v28 = vperm.slane %v22, 0
    %v29 = vmul.f32 %v26, %v28
    %30 = vset.pattern.permute.xlu0 1
    %31 = vperm.xlu0 %30, %v21
    %v32 = vpop.permute.xlu0 %31
    %v34 = vperm.slane %v22, 1
    %v35 = vmul.f32 %v32, %v34
    %v36 = vadd.f32 %v29, %v35
    %37 = vset.pattern.permute.xlu0 2
    %38 = vperm.xlu0 %37, %v21
    %v39 = vpop.permute.xlu0 %38
    %v41 = vperm.slane %v22, 2
    %v42 = vmul.f32 %v39, %v41
    %v43 = vadd.f32 %v36, %v42
    %44 = vset.pattern.permute.xlu0 3
    %45 = vperm.xlu0 %44, %v21
    %v46 = vpop.permute.xlu0 %45
    %v48 = vperm.slane %v22, 3
    %v49 = vmul.f32 %v46, %v48
    %v50 = vadd.f32 %v43, %v49
    %51 = vst [vmem:[#allocation2] sm:$0xff] %v50
    %v52 = vld [vmem:[%s0] sm:$0xff]
    %53 = vset.pattern.permute.xlu0 0
    %54 = vperm.xlu0 %53, %v52
    %v55 = vpop.permute.xlu0 %54
    %v56 = vld [vmem:[%s3] sm:$0xff]
    %v57 = vperm.slane %v56, %v55
    %58 = vst [vmem:[#allocation4] sm:$0xff] %v57
    // Predicated region
    $region18: #{tpu_custom_call.1} parent=1 // pred_check
      _
    $region19: #{tpu_custom_call.1} parent=1 // pred_check_branch
      %60 = sbr.rel (0) target = $region21
    $region20: #{tpu_custom_call.1} parent=1 // pred_region
      %62 = vsyncadd [#allocation3], 0
      %s64 = sshll.u32 [#allocation2], 4
      %s65 = int_to_ptr.vmem [resolvable:$true] %s64
      %s66 = sshll.u32 %s4, 4
      %s67 = int_to_ptr.hbm [resolvable:$true] %s66
      %69 = dma.vmem_to_hbm [thread:$0]  %s65, 128, %s67, [#allocation3]
    $region21: #{tpu_custom_call.1} parent=1 // pred_fallthru
      _
    // Predicated region
    $region22: #{tpu_custom_call.1} parent=1 // pred_check
      _
    $region23: #{tpu_custom_call.1} parent=1 // pred_check_branch
      %71 = sbr.rel (0) target = $region25
    $region24: #{tpu_custom_call.1} parent=1 // pred_region
      %73 = vsyncadd [#allocation5], 0
      %s75 = sshll.u32 [#allocation4], 4
      %s76 = int_to_ptr.vmem [resolvable:$true] %s75
      %s77 = sshll.u32 %s5, 4
      %s78 = int_to_ptr.hbm [resolvable:$true] %s77
      %80 = dma.vmem_to_hbm [thread:$0]  %s76, 128, %s78, [#allocation5]
    $region25: #{tpu_custom_call.1} parent=1 // pred_fallthru
      _
    // Predicated region
    $region26: #{tpu_custom_call.1} parent=1 // pred_check
      _
    $region27: #{tpu_custom_call.1} parent=1 // pred_check_branch
      %82 = sbr.rel (0) target = $region29
    $region28: #{tpu_custom_call.1} parent=1 // pred_region
      %84 = dma.done [#allocation3], 128
    $region29: #{tpu_custom_call.1} parent=1 // pred_fallthru
      _
    // Predicated region
    $region30: #{tpu_custom_call.1} parent=1 // pred_check
      _
    $region31: #{tpu_custom_call.1} parent=1 // pred_check_branch
      %86 = sbr.rel (0) target = $region33
    $region32: #{tpu_custom_call.1} parent=1 // pred_region
      %88 = dma.done [#allocation5], 128
    $region33: #{tpu_custom_call.1} parent=1 // pred_fallthru
      _
    %89 = vsyncpa [#allocation3], 1
    %90 = vsyncpa [#allocation5], 1

// kernel: a_call__.1
$region0: #{a_call__.1}
  #allocation0 [shape = 'u32[]', space=smem, size = 0x4, offset = 0x4, fixed_abs, tag = 'smem constant byte address 0x4 - core index']
  #allocation1 [shape = 'u32[72,128]{1,0:T(1,128)}', space=vmem, size = 0x9000, scoped, tag = 'internal scratch']
  %s0 = inlined_call_operand.vmem [shape: s32[16,1], index: 0, kind: input, shape index: {}]
  %s1 = inlined_call_operand.vmem [shape: f32[16,4], index: 1, kind: input, shape index: {}]
  %s2 = inlined_call_operand.vmem [shape: f32[4,128], index: 2, kind: input, shape index: {}]
  %s3 = inlined_call_operand.vmem [shape: f32[8,128], index: 3, kind: input, shape index: {}]
  %s4 = inlined_call_operand.vmem [shape: f32[16,128], index: 4, kind: output, shape index: {0}]
  %s5 = inlined_call_operand.vmem [shape: f32[16,128], index: 5, kind: output, shape index: {1}]
  %6 = xla_tuple %s4, %s5
  %s7 = sld [smem:[#allocation0]]
  $region34: #{a_call__.1} parent=0
    _
  %s9 = ssub.s32 1, %s7
  %s10 = scalar_select 0, %s9, %s7
  // Predicated region
  $region2: #{a_call__.1} parent=0 // pred_check
    _
  $region3: #{a_call__.1} parent=0 // pred_check_branch
    %12 = sbr.rel (0) target = $region5
  $region4: #{a_call__.1} parent=0 // pred_region
    _
  $region5: #{a_call__.1} parent=0 // pred_fallthru
    _
  // Predicated region
  $region6: #{a_call__.1} parent=0 // pred_check
    _
  $region7: #{a_call__.1} parent=0 // pred_check_branch
    %14 = sbr.rel (0) target = $region9
  $region8: #{a_call__.1} parent=0 // pred_region
    _
  $region9: #{a_call__.1} parent=0 // pred_fallthru
    _
  // Predicated region
  $region10: #{a_call__.1} parent=0 // pred_check
    _
  $region11: #{a_call__.1} parent=0 // pred_check_branch
    %16 = sbr.rel (0) target = $region13
  $region12: #{a_call__.1} parent=0 // pred_region
    _
  $region13: #{a_call__.1} parent=0 // pred_fallthru
    _
  // Predicated region
  $region14: #{a_call__.1} parent=0 // pred_check
    _
  $region15: #{a_call__.1} parent=0 // pred_check_branch
    %18 = sbr.rel (0) target = $region17
  $region16: #{a_call__.1} parent=0 // pred_region
    _
  $region17: #{a_call__.1} parent=0 // pred_fallthru
    _
  %v19 = vld [vmem:[%s1] sm:$0xff]
  %v20 = vld [vmem:[%s1 + $0x8] sm:$0xff]
  %v21 = vld [vmem:[%s2] sm:$0xf]
  %23 = vset.pattern.permute.xlu0 0
  %24 = vperm.xlu0 %23, %v19
  %v25 = vpop.permute.xlu0 %24
  %28 = vset.pattern.permute.xlu0 0
  %29 = vperm.xlu0 %28, %v20
  %v30 = vpop.permute.xlu0 %29
  %v32 = vperm.slane %v21, 0
  %v33 = vmul.f32 %v25, %v32
  %v34 = vmul.f32 %v30, %v32
  %35 = vset.pattern.permute.xlu0 1
  %36 = vperm.xlu0 %35, %v19
  %v37 = vpop.permute.xlu0 %36
  %39 = vset.pattern.permute.xlu0 1
  %40 = vperm.xlu0 %39, %v20
  %v41 = vpop.permute.xlu0 %40
  %v43 = vperm.slane %v21, 1
  %v44 = vmul.f32 %v37, %v43
  %v45 = vmul.f32 %v41, %v43
  %v46 = vadd.f32 %v33, %v44
  %v47 = vadd.f32 %v34, %v45
  %48 = vset.pattern.permute.xlu0 2
  %49 = vperm.xlu0 %48, %v19
  %v50 = vpop.permute.xlu0 %49
  %52 = vset.pattern.permute.xlu0 2
  %53 = vperm.xlu0 %52, %v20
  %v54 = vpop.permute.xlu0 %53
  %v56 = vperm.slane %v21, 2
  %v57 = vmul.f32 %v50, %v56
  %v58 = vmul.f32 %v54, %v56
  %v59 = vadd.f32 %v46, %v57
  %v60 = vadd.f32 %v47, %v58
  %61 = vset.pattern.permute.xlu0 3
  %62 = vperm.xlu0 %61, %v19
  %v63 = vpop.permute.xlu0 %62
  %65 = vset.pattern.permute.xlu0 3
  %66 = vperm.xlu0 %65, %v20
  %v67 = vpop.permute.xlu0 %66
  %v69 = vperm.slane %v21, 3
  %v70 = vmul.f32 %v63, %v69
  %v71 = vmul.f32 %v67, %v69
  %v72 = vadd.f32 %v59, %v70
  %v73 = vadd.f32 %v60, %v71
  %74 = vst [vmem:[%s4] sm:$0xff] %v72
  %75 = vst [vmem:[%s4 + $0x8] sm:$0xff] %v73
  %v76 = vld [vmem:[%s0] sm:$0xff]
  %v77 = vld [vmem:[%s0 + $0x8] sm:$0xff]
  %v78 = vlaneseq
  %v79 = vand.u32 %v78, 127
  %80 = vset.pattern.permute.xlu0 0
  %81 = vperm.xlu0 %80, %v76
  %v82 = vpop.permute.xlu0 %81
  %83 = vset.pattern.permute.xlu0 0
  %84 = vperm.xlu0 %83, %v77
  %v85 = vpop.permute.xlu0 %84
  %vm86 = vcmp.eq.s32.totalorder %v82, %v79
  %vm87 = vcmp.eq.s32.totalorder %v85, %v79
  %v88 = vsel %vm86, 1, 0
  %v89 = vsel %vm87, 1, 0
  %v90 = vcvt.s32.f32 %v88
  %v91 = vcvt.s32.f32 %v89
  %v92 = vld [vmem:[%s3] sm:$0xff]
  %vm93 = vcmask 64512
  %v95 = vsel %vm93, %v90, 0
  %v98 = vsel %vm93, %v91, 0
  %100 = vmatpush.msra.mxu0 0.0
  %101 = vmatpush.msra.mxu0 0.0
  %102 = vmatpush.msra.mxu0 0.0
  %103 = vmatpush.msra.mxu0 0.0
  %104 = vmatpush.msra.mxu0 0.0
  %105 = vmatpush.msra.mxu0 0.0
  %106 = vmatpush.msra.mxu0 0.0
  %107 = vmatpush.msra.mxu0 0.0
  %108 = vmatpush.msra.mxu0 0.0
  %109 = vmatpush.msra.mxu0 0.0
  %110 = vmatpush.msra.mxu0 0.0
  %111 = vmatpush.msra.mxu0 0.0
  %112 = vmatpush.msra.mxu0 0.0
  %113 = vmatpush.msra.mxu0 0.0
  %114 = vmatpush.msra.mxu0 0.0
  %115 = vmatpush.msra.mxu0 %v92
  %116 = vmatmul.f32.gmra.mxu0 %v95
  %v117 = vpop.f32.mrf.mxu0
  %v118 = vadd.f32 0.0, %v117
  %119 = vmatmul.f32.gmra.mxu0 %v98
  %v120 = vpop.f32.mrf.mxu0
  %v121 = vadd.f32 0.0, %v120
  %122 = vdwg.mxu0
  %123 = vst [vmem:[%s5] sm:$0xff] %v118
  %124 = vst [vmem:[%s5 + $0x8] sm:$0xff] %v121
  // Predicated region
  $region18: #{a_call__.1} parent=0 // pred_check
    _
  $region19: #{a_call__.1} parent=0 // pred_check_branch
    %126 = sbr.rel (0) target = $region21
  $region20: #{a_call__.1} parent=0 // pred_region
    _
  $region21: #{a_call__.1} parent=0 // pred_fallthru
    _
  // Predicated region
  $region22: #{a_call__.1} parent=0 // pred_check
    _
  $region23: #{a_call__.1} parent=0 // pred_check_branch
    %128 = sbr.rel (0) target = $region25
  $region24: #{a_call__.1} parent=0 // pred_region
    _
  $region25: #{a_call__.1} parent=0 // pred_fallthru
    _
  // Predicated region
  $region26: #{a_call__.1} parent=0 // pred_check
    _
  $region27: #{a_call__.1} parent=0 // pred_check_branch
    %130 = sbr.rel (0) target = $region29
  $region28: #{a_call__.1} parent=0 // pred_region
    _
  $region29: #{a_call__.1} parent=0 // pred_fallthru
    _
  // Predicated region
  $region30: #{a_call__.1} parent=0 // pred_check
    _
  $region31: #{a_call__.1} parent=0 // pred_check_branch
    %132 = sbr.rel (0) target = $region33
  $region32: #{a_call__.1} parent=0 // pred_region
    _
  $region33: #{a_call__.1} parent=0 // pred_fallthru
    _

</llo_original>
